<compile_context>
chip_gen: v6e
topology: v6e:2x2x1
jax: 0.10.0
libtpu: 0.0.40
codegen_flags: <defaults>
</compile_context>

<pallas_src>
import jax
import jax.numpy as jnp
from jax import lax
from jax.experimental import pallas as pl
from jax.experimental.pallas import tpu as pltpu


def nkn_kernel(x_ref, w1_ref, b1_ref, w2_ref, b2_ref, w3_ref, b3_ref, oT_ref):
    # x_ref: (tb, input_dim) f32, natural layout.  Weights in PyTorch (out, in) layout,
    # biases (out, 1).  All activations are lane-dense (feature-on-sublanes, batch-on-lanes).
    nt = (((1,), (1,)), ((), ()))  # contract last dim of lhs with last dim of rhs ("NT")
    # h1 = relu(W1 @ x^T + b1)                          -> (hidden, tb)
    h = lax.dot_general(w1_ref[...], x_ref[...], nt,
                        preferred_element_type=jnp.float32) + b1_ref[...]
    h = jnp.maximum(h, 0.0)
    # h2 = sin(W2 @ h1 + b2)                            -> (hidden, tb)
    h = jnp.dot(w2_ref[...], h, preferred_element_type=jnp.float32) + b2_ref[...]
    h = jnp.sin(h)
    # out^T = W3 @ h2 + b3                              -> (out_dim, tb), lane-dense store
    oT_ref[...] = jnp.dot(w3_ref[...], h, preferred_element_type=jnp.float32) + b3_ref[...]


def _choose_batch_tile(B, max_tile=32768):
    """One grid step for B <= max_tile; otherwise a lane-aligned 32768-row tile.

    32768 rows/step ~= 2 MiB of x f32 per step (plus (32, tb) f32 intermediates), i.e. ~us of
    work per ~0.35 us step overhead, while keeping peak VMEM well under v7x's 64 MiB.
    """
    if B <= max_tile:
        return B
    return max_tile


def nkn_forward(x, params, *, block_batch=None, transposed_output=False):
    """x: (B, input_dim) f32.  params: PyTorch-layout weights (out, in), biases (out, 1), f32.

    Returns (B, out_dim) by default (PyTorch semantics).  Set transposed_output=True to get the
    kernel-native (out_dim, B) layout and skip the output transpose pass entirely.
    """
    B, input_dim = x.shape
    hidden_dim = params["w1"].shape[0]
    out_dim = params["w3"].shape[0]

    tb = _choose_batch_tile(B) if block_batch is None else int(block_batch)
    grid_b = pl.cdiv(B, tb)
    Bp = grid_b * tb
    if tb != Bp and tb % 128 != 0:
        raise ValueError("block_batch must be a multiple of 128 or cover the whole batch")

    if Bp != B:
        # Zero-pad the batch.  Padded columns of the output are garbage (bias/sin-of-bias)
        # and are sliced off below before returning.
        x = jnp.pad(x, ((0, Bp - B), (0, 0)))

    w1, b1 = params["w1"], params["b1"]       # (hidden, in),  (hidden, 1)
    w2, b2 = params["w2"], params["b2"]       # (hidden, hid), (hidden, 1)
    w3, b3 = params["w3"], params["b3"]       # (out, hid),    (out, 1)

    # Grid-invariant index_maps -> weights/biases stay VMEM-resident across grid steps.
    full = lambda shape: pl.BlockSpec(shape, lambda i: (0, 0))

    cost = pl.CostEstimate(
        flops=2 * Bp * (input_dim * hidden_dim + hidden_dim * hidden_dim
                        + hidden_dim * out_dim),
        transcendentals=Bp * hidden_dim,                      # sin
        bytes_accessed=(x.size + out_dim * Bp) * 4
        + (w1.size + w2.size + w3.size + b1.size + b2.size + b3.size) * 4,
    )

    oT = pl.pallas_call(
        nkn_kernel,
        out_shape=jax.ShapeDtypeStruct((out_dim, Bp), jnp.float32),
        grid_spec=pl.GridSpec(
            grid=(grid_b,),
            in_specs=[
                pl.BlockSpec((tb, input_dim), lambda i: (i, 0)),   # x, natural layout
                full((hidden_dim, input_dim)),                     # W1
                full((hidden_dim, 1)),                             # b1
                full((hidden_dim, hidden_dim)),                    # W2
                full((hidden_dim, 1)),                             # b2
                full((out_dim, hidden_dim)),                       # W3
                full((out_dim, 1)),                                # b3
            ],
            out_specs=pl.BlockSpec((out_dim, tb), lambda i: (0, i)),
        ),
        compiler_params=pltpu.CompilerParams(
            dimension_semantics=("parallel",),
            # ~20-25 MiB peak at tb=32768; 48 MiB is safe on v5e/v6e (128 MiB physical)
            # and on v7x (64 MiB physical) while leaving pipeline headroom.
            vmem_limit_bytes=48 * 1024 * 1024,
        ),
        cost_estimate=cost,
    )(x, w1, b1, w2, b2, w3, b3)

    oT = oT[:, :B]
    if transposed_output:
        return oT                                   # (out_dim, B), no extra HBM pass
    return oT.T                                     # (B, out_dim), PyTorch layout


def init_nkn_params(key, input_dim, hidden_dim=32, out_dim=2):
    """nn.Linear default init: U(-1/sqrt(fan_in), 1/sqrt(fan_in)); PyTorch (out, in) layout."""
    ks = jax.random.split(key, 6)

    def lin(kw, kb, fan_in, fan_out):
        bound = 1.0 / jnp.sqrt(fan_in)
        w = jax.random.uniform(kw, (fan_out, fan_in), jnp.float32, -bound, bound)
        b = jax.random.uniform(kb, (fan_out, 1), jnp.float32, -bound, bound)
        return w, b

    w1, b1 = lin(ks[0], ks[1], input_dim, hidden_dim)
    w2, b2 = lin(ks[2], ks[3], hidden_dim, hidden_dim)
    w3, b3 = lin(ks[4], ks[5], hidden_dim, out_dim)
    return {"w1": w1, "b1": b1, "w2": w2, "b2": b2, "w3": w3, "b3": b3}


def nkn_reference(x, p):
    """Pure-JAX f32 reference matching the PyTorch module."""
    h = jnp.maximum(x @ p["w1"].T + p["b1"].T, 0.0)
    h = jnp.sin(h @ p["w2"].T + p["b2"].T)
    return h @ p["w3"].T + p["b3"].T


if __name__ == "__main__":
    key = jax.random.PRNGKey(0)
    k_x, k_p = jax.random.split(key)

    batch, input_dim, hidden_dim = 16, 16, 32
    x = jax.random.normal(k_x, (batch, input_dim), jnp.float32)
    params = init_nkn_params(k_p, input_dim, hidden_dim)

    # Small batch: single grid step, no padding.
    out = jax.block_until_ready(nkn_forward(x, params))
    ref = nkn_reference(x, params)
    assert out.shape == (batch, 2), out.shape
    # f32 end to end; tolerance is conservative only to cover MXU f32-pass rounding.
    assert jnp.allclose(out, ref, atol=2e-2, rtol=2e-2), "mismatch vs reference (small batch)"

    # Exercise the multi-step + padded path (B=300, tb=128 -> 3 steps, Bp=384).
    batch2 = 300
    x2 = jax.random.normal(k_x, (batch2, input_dim), jnp.float32)
    out2 = jax.block_until_ready(nkn_forward(x2, params, block_batch=128))
    ref2 = nkn_reference(x2, params)
    assert out2.shape == (batch2, 2), out2.shape
    assert jnp.allclose(out2, ref2, atol=2e-2, rtol=2e-2), "mismatch vs reference (tiled batch)"

    print("KERNEL_OK")
</pallas_src>

<mosaic_0001>
module attributes {stable_mosaic.version = 11 : i64} {
  func.func @nkn_kernel(%arg0: i32, %arg1: memref<16x16xf32, #tpu.memory_space<vmem>>, %arg2: memref<32x16xf32, #tpu.memory_space<vmem>>, %arg3: memref<32x1xf32, #tpu.memory_space<vmem>>, %arg4: memref<32x32xf32, #tpu.memory_space<vmem>>, %arg5: memref<32x1xf32, #tpu.memory_space<vmem>>, %arg6: memref<2x32xf32, #tpu.memory_space<vmem>>, %arg7: memref<2x1xf32, #tpu.memory_space<vmem>>, %arg8: memref<2x16xf32, #tpu.memory_space<vmem>>) attributes {dimension_semantics = [#tpu.dimension_semantics<parallel>], iteration_bounds = array<i64: 1>, scalar_prefetch = 0 : i64, scratch_operands = 0 : i64, tpu.core_type = #tpu.core_type<tc>, window_params = [{transform_indices = @transform_0, window_bounds = array<i64: 16, 16>}, {pipeline_mode = #tpu.pipeline_mode<synchronous>, transform_indices = @transform_1, window_bounds = array<i64: 32, 16>}, {pipeline_mode = #tpu.pipeline_mode<synchronous>, transform_indices = @transform_2, window_bounds = array<i64: 32, 1>}, {pipeline_mode = #tpu.pipeline_mode<synchronous>, transform_indices = @transform_3, window_bounds = array<i64: 32, 32>}, {pipeline_mode = #tpu.pipeline_mode<synchronous>, transform_indices = @transform_4, window_bounds = array<i64: 32, 1>}, {pipeline_mode = #tpu.pipeline_mode<synchronous>, transform_indices = @transform_5, window_bounds = array<i64: 2, 32>}, {pipeline_mode = #tpu.pipeline_mode<synchronous>, transform_indices = @transform_6, window_bounds = array<i64: 2, 1>}, {transform_indices = @transform_7, window_bounds = array<i64: 2, 16>}]} {
    %c0 = arith.constant 0 : index
    %c0_0 = arith.constant 0 : index
    %0 = vector.load %arg2[%c0, %c0_0] : memref<32x16xf32, #tpu.memory_space<vmem>>, vector<32x16xf32>
    %c0_1 = arith.constant 0 : index
    %c0_2 = arith.constant 0 : index
    %1 = vector.load %arg1[%c0_1, %c0_2] : memref<16x16xf32, #tpu.memory_space<vmem>>, vector<16x16xf32>
    %cst = arith.constant dense<0.000000e+00> : vector<32x16xf32>
    %2 = tpu.matmul %0, %1, %cst {dimension_numbers = #tpu.dot_dimension_numbers<[1], [1], [0], [0], [0, 0, 1, 0], [], []>} : vector<32x16xf32>, vector<16x16xf32>, vector<32x16xf32> -> vector<32x16xf32>
    %c0_3 = arith.constant 0 : index
    %c0_4 = arith.constant 0 : index
    %3 = vector.load %arg3[%c0_3, %c0_4] : memref<32x1xf32, #tpu.memory_space<vmem>>, vector<32x1xf32>
    %4 = vector.broadcast %3 : vector<32x1xf32> to vector<32x16xf32>
    %5 = arith.addf %2, %4 : vector<32x16xf32>
    %cst_5 = arith.constant 0.000000e+00 : f32
    %6 = vector.broadcast %cst_5 : f32 to vector<32x16xf32>
    %7 = arith.maximumf %5, %6 : vector<32x16xf32>
    %c0_6 = arith.constant 0 : index
    %c0_7 = arith.constant 0 : index
    %8 = vector.load %arg4[%c0_6, %c0_7] : memref<32x32xf32, #tpu.memory_space<vmem>>, vector<32x32xf32>
    %cst_8 = arith.constant dense<0.000000e+00> : vector<32x16xf32>
    %9 = tpu.matmul %8, %7, %cst_8 {dimension_numbers = #tpu.dot_dimension_numbers<[1], [0], [0], [1], [0, 0, 1, 1], [], []>} : vector<32x32xf32>, vector<32x16xf32>, vector<32x16xf32> -> vector<32x16xf32>
    %c0_9 = arith.constant 0 : index
    %c0_10 = arith.constant 0 : index
    %10 = vector.load %arg5[%c0_9, %c0_10] : memref<32x1xf32, #tpu.memory_space<vmem>>, vector<32x1xf32>
    %11 = vector.broadcast %10 : vector<32x1xf32> to vector<32x16xf32>
    %12 = arith.addf %9, %11 : vector<32x16xf32>
    %13 = math.sin %12 : vector<32x16xf32>
    %c0_11 = arith.constant 0 : index
    %c0_12 = arith.constant 0 : index
    %14 = vector.load %arg6[%c0_11, %c0_12] : memref<2x32xf32, #tpu.memory_space<vmem>>, vector<2x32xf32>
    %cst_13 = arith.constant dense<0.000000e+00> : vector<2x16xf32>
    %15 = tpu.matmul %14, %13, %cst_13 {dimension_numbers = #tpu.dot_dimension_numbers<[1], [0], [0], [1], [0, 0, 1, 1], [], []>} : vector<2x32xf32>, vector<32x16xf32>, vector<2x16xf32> -> vector<2x16xf32>
    %c0_14 = arith.constant 0 : index
    %c0_15 = arith.constant 0 : index
    %16 = vector.load %arg7[%c0_14, %c0_15] : memref<2x1xf32, #tpu.memory_space<vmem>>, vector<2x1xf32>
    %17 = vector.broadcast %16 : vector<2x1xf32> to vector<2x16xf32>
    %18 = arith.addf %15, %17 : vector<2x16xf32>
    %c0_16 = arith.constant 0 : index
    %c0_17 = arith.constant 0 : index
    %19 = vector.load %arg8[%c0_16, %c0_17] : memref<2x16xf32, #tpu.memory_space<vmem>>, vector<2x16xf32>
    tpu.vector_store %arg8[%c0_16, %c0_17], %18 {strides = array<i32>} : memref<2x16xf32, #tpu.memory_space<vmem>>, vector<2x16xf32>,
    return
  }
  func.func @transform_0(%arg0: i32) -> (i32, i32) {
    %c0_i32 = arith.constant 0 : i32
    %c0_i32_0 = arith.constant 0 : i32
    return %arg0, %c0_i32 : i32, i32
  }
  func.func @transform_1(%arg0: i32) -> (i32, i32) {
    %c0_i32 = arith.constant 0 : i32
    %c0_i32_0 = arith.constant 0 : i32
    %c0_i32_1 = arith.constant 0 : i32
    return %c0_i32, %c0_i32_0 : i32, i32
  }
  func.func @transform_2(%arg0: i32) -> (i32, i32) {
    %c0_i32 = arith.constant 0 : i32
    %c0_i32_0 = arith.constant 0 : i32
    %c0_i32_1 = arith.constant 0 : i32
    return %c0_i32, %c0_i32_0 : i32, i32
  }
  func.func @transform_3(%arg0: i32) -> (i32, i32) {
    %c0_i32 = arith.constant 0 : i32
    %c0_i32_0 = arith.constant 0 : i32
    %c0_i32_1 = arith.constant 0 : i32
    return %c0_i32, %c0_i32_0 : i32, i32
  }
  func.func @transform_4(%arg0: i32) -> (i32, i32) {
    %c0_i32 = arith.constant 0 : i32
    %c0_i32_0 = arith.constant 0 : i32
    %c0_i32_1 = arith.constant 0 : i32
    return %c0_i32, %c0_i32_0 : i32, i32
  }
  func.func @transform_5(%arg0: i32) -> (i32, i32) {
    %c0_i32 = arith.constant 0 : i32
    %c0_i32_0 = arith.constant 0 : i32
    %c0_i32_1 = arith.constant 0 : i32
    return %c0_i32, %c0_i32_0 : i32, i32
  }
  func.func @transform_6(%arg0: i32) -> (i32, i32) {
    %c0_i32 = arith.constant 0 : i32
    %c0_i32_0 = arith.constant 0 : i32
    %c0_i32_1 = arith.constant 0 : i32
    return %c0_i32, %c0_i32_0 : i32, i32
  }
  func.func @transform_7(%arg0: i32) -> (i32, i32) {
    %c0_i32 = arith.constant 0 : i32
    %c0_i32_0 = arith.constant 0 : i32
    return %c0_i32, %arg0 : i32, i32
  }
}

</mosaic_0001>

<llo_original>
// kernel: tpu_custom_call.1
$region0: #{tpu_custom_call.1}
  #allocation0 [shape = 'u32[]', space=smem, size = 0x4, offset = 0x4, fixed_abs, tag = 'smem constant byte address 0x4 - core index']
  #allocation1 [shape = 'u32[144,128]{1,0:T(1,128)}', space=vmem, size = 0x12000, scoped, tag = 'internal scratch']
  %s0 = inlined_call_operand.vmem [shape: f32[16,16], index: 0, kind: input, shape index: {}]
  %s1 = inlined_call_operand.vmem [shape: f32[32,16], index: 1, kind: input, shape index: {}]
  %s2 = inlined_call_operand.vmem [shape: f32[32,1], index: 2, kind: input, shape index: {}]
  %s3 = inlined_call_operand.vmem [shape: f32[32,32], index: 3, kind: input, shape index: {}]
  %s4 = inlined_call_operand.vmem [shape: f32[32,1], index: 4, kind: input, shape index: {}]
  %s5 = inlined_call_operand.vmem [shape: f32[2,32], index: 5, kind: input, shape index: {}]
  %s6 = inlined_call_operand.vmem [shape: f32[2,1], index: 6, kind: input, shape index: {}]
  %s7 = inlined_call_operand.hbm [shape: f32[2,16], index: 7, kind: output, shape index: {}]
  %s8 = sld [smem:[#allocation0]]
  $region38: #{tpu_custom_call.1} parent=0
    _
  %s10 = ssub.s32 1, %s8
  %s11 = scalar_select 0, %s10, %s8
  $region1: #{tpu_custom_call.1} parent=0
    #allocation2 [shape = 'u8[1024]{0}', space=vmem, size = 0x400, scoped, tag = 'output window, operand 0, single buffered']
    #allocation3 [shape = 's32[1]{0}', space=sflag, size = 0x4, scoped, tag = 'scoped memory for tpu_custom_call.1']
    %12 = vsyncpa [#allocation3], 0
    // Predicated region
    $region2: #{tpu_custom_call.1} parent=1 // pred_check
      _
    $region3: #{tpu_custom_call.1} parent=1 // pred_check_branch
      %14 = sbr.rel (0) target = $region5
    $region4: #{tpu_custom_call.1} parent=1 // pred_region
      _
    $region5: #{tpu_custom_call.1} parent=1 // pred_fallthru
      _
    // Predicated region
    $region6: #{tpu_custom_call.1} parent=1 // pred_check
      _
    $region7: #{tpu_custom_call.1} parent=1 // pred_check_branch
      %16 = sbr.rel (0) target = $region9
    $region8: #{tpu_custom_call.1} parent=1 // pred_region
      _
    $region9: #{tpu_custom_call.1} parent=1 // pred_fallthru
      _
    // Predicated region
    $region10: #{tpu_custom_call.1} parent=1 // pred_check
      _
    $region11: #{tpu_custom_call.1} parent=1 // pred_check_branch
      %18 = sbr.rel (0) target = $region13
    $region12: #{tpu_custom_call.1} parent=1 // pred_region
      _
    $region13: #{tpu_custom_call.1} parent=1 // pred_fallthru
      _
    // Predicated region
    $region14: #{tpu_custom_call.1} parent=1 // pred_check
      _
    $region15: #{tpu_custom_call.1} parent=1 // pred_check_branch
      %20 = sbr.rel (0) target = $region17
    $region16: #{tpu_custom_call.1} parent=1 // pred_region
      _
    $region17: #{tpu_custom_call.1} parent=1 // pred_fallthru
      _
    // Predicated region
    $region18: #{tpu_custom_call.1} parent=1 // pred_check
      _
    $region19: #{tpu_custom_call.1} parent=1 // pred_check_branch
      %22 = sbr.rel (0) target = $region21
    $region20: #{tpu_custom_call.1} parent=1 // pred_region
      _
    $region21: #{tpu_custom_call.1} parent=1 // pred_fallthru
      _
    // Predicated region
    $region22: #{tpu_custom_call.1} parent=1 // pred_check
      _
    $region23: #{tpu_custom_call.1} parent=1 // pred_check_branch
      %24 = sbr.rel (0) target = $region25
    $region24: #{tpu_custom_call.1} parent=1 // pred_region
      _
    $region25: #{tpu_custom_call.1} parent=1 // pred_fallthru
      _
    // Predicated region
    $region26: #{tpu_custom_call.1} parent=1 // pred_check
      _
    $region27: #{tpu_custom_call.1} parent=1 // pred_check_branch
      %26 = sbr.rel (0) target = $region29
    $region28: #{tpu_custom_call.1} parent=1 // pred_region
      _
    $region29: #{tpu_custom_call.1} parent=1 // pred_fallthru
      _
    %v27 = vld [vmem:[%s1] sm:$0xff]
    %v28 = vld [vmem:[%s1 + $0x8] sm:$0xff]
    %v29 = vld [vmem:[%s1 + $0x10] sm:$0xff]
    %v30 = vld [vmem:[%s1 + $0x18] sm:$0xff]
    %v31 = vld [vmem:[%s0] sm:$0xff]
    %v32 = vld [vmem:[%s0 + $0x8] sm:$0xff]
    %v33 = vld [vmem:[%s2] sm:$0xff]
    %v34 = vld [vmem:[%s2 + $0x8] sm:$0xff]
    %v35 = vld [vmem:[%s2 + $0x10] sm:$0xff]
    %v36 = vld [vmem:[%s2 + $0x18] sm:$0xff]
    %38 = vset.pattern.permute.xlu0 0
    %39 = vperm.xlu0 %38, %v33
    %v40 = vpop.permute.xlu0 %39
    %43 = vset.pattern.permute.xlu0 0
    %44 = vperm.xlu0 %43, %v34
    %v45 = vpop.permute.xlu0 %44
    %48 = vset.pattern.permute.xlu0 0
    %49 = vperm.xlu0 %48, %v35
    %v50 = vpop.permute.xlu0 %49
    %53 = vset.pattern.permute.xlu0 0
    %54 = vperm.xlu0 %53, %v36
    %v55 = vpop.permute.xlu0 %54
    %vm57 = vcmask 130048
    %v59 = vsel %vm57, %v27, 0
    %v62 = vsel %vm57, %v28, 0
    %v65 = vsel %vm57, %v29, 0
    %v68 = vsel %vm57, %v30, 0
    %v71 = vsel %vm57, %v31, 0
    %v74 = vsel %vm57, %v32, 0
    %76 = vmatprep.subr.mxu0 0.0
    %77 = vmatpush1.xpose.msra.mxu0 0.0
    %78 = vmatprep.subr.mxu0 0.0
    %79 = vmatpush1.xpose.msra.mxu0 0.0
    %80 = vmatprep.subr.mxu0 0.0
    %81 = vmatpush1.xpose.msra.mxu0 0.0
    %82 = vmatprep.subr.mxu0 0.0
    %83 = vmatpush1.xpose.msra.mxu0 0.0
    %84 = vmatprep.subr.mxu0 0.0
    %85 = vmatpush1.xpose.msra.mxu0 0.0
    %86 = vmatprep.subr.mxu0 0.0
    %87 = vmatpush1.xpose.msra.mxu0 0.0
    %88 = vmatprep.subr.mxu0 0.0
    %89 = vmatpush1.xpose.msra.mxu0 0.0
    %90 = vmatprep.subr.mxu0 0.0
    %91 = vmatpush1.xpose.msra.mxu0 0.0
    %92 = vmatprep.subr.mxu0 0.0
    %93 = vmatpush1.xpose.msra.mxu0 0.0
    %94 = vmatprep.subr.mxu0 0.0
    %95 = vmatpush1.xpose.msra.mxu0 0.0
    %96 = vmatprep.subr.mxu0 0.0
    %97 = vmatpush1.xpose.msra.mxu0 0.0
    %98 = vmatprep.subr.mxu0 0.0
    %99 = vmatpush1.xpose.msra.mxu0 0.0
    %100 = vmatprep.subr.mxu0 0.0
    %101 = vmatpush1.xpose.msra.mxu0 0.0
    %102 = vmatprep.subr.mxu0 0.0
    %103 = vmatpush1.xpose.msra.mxu0 0.0
    %104 = vmatprep.subr.mxu0 0.0
    %105 = vmatpush1.xpose.msra.mxu0 %v74
    %106 = vmatprep.subr.mxu0 0.0
    %107 = vmatpush1.xpose.msra.mxu0 %v71
    %108 = vmatprep.subr.mxu0 0.0
    %109 = vmatpush2.xpose.msra.mxu0 0.0
    %110 = vmatprep.subr.mxu0 0.0
    %111 = vmatpush2.xpose.msra.mxu0 0.0
    %112 = vmatprep.subr.mxu0 0.0
    %113 = vmatpush2.xpose.msra.mxu0 0.0
    %114 = vmatprep.subr.mxu0 0.0
    %115 = vmatpush2.xpose.msra.mxu0 0.0
    %116 = vmatprep.subr.mxu0 0.0
    %117 = vmatpush2.xpose.msra.mxu0 0.0
    %118 = vmatprep.subr.mxu0 0.0
    %119 = vmatpush2.xpose.msra.mxu0 0.0
    %120 = vmatprep.subr.mxu0 0.0
    %121 = vmatpush2.xpose.msra.mxu0 0.0
    %122 = vmatprep.subr.mxu0 0.0
    %123 = vmatpush2.xpose.msra.mxu0 0.0
    %124 = vmatprep.subr.mxu0 0.0
    %125 = vmatpush2.xpose.msra.mxu0 0.0
    %126 = vmatprep.subr.mxu0 0.0
    %127 = vmatpush2.xpose.msra.mxu0 0.0
    %128 = vmatprep.subr.mxu0 0.0
    %129 = vmatpush2.xpose.msra.mxu0 0.0
    %130 = vmatprep.subr.mxu0 0.0
    %131 = vmatpush2.xpose.msra.mxu0 0.0
    %132 = vmatprep.subr.mxu0 0.0
    %133 = vmatpush2.xpose.msra.mxu0 0.0
    %134 = vmatprep.subr.mxu0 0.0
    %135 = vmatpush2.xpose.msra.mxu0 0.0
    %136 = vmatprep.subr.mxu0 0.0
    %137 = vmatpush2.xpose.msra.mxu0 0.0
    %138 = vmatprep.subr.mxu0 0.0
    %139 = vmatpush2.xpose.msra.mxu0 0.0
    %140 = vmatprep.mubr.f32.mxu0 0.0
    %141 = vmatmul.mubr.f32.gmra.mxu0 %v59
    %v142 = vpop.f32.mrf.mxu0
    %v143 = vadd.f32 %v40, %v142
    %v144 = vpop.f32.mrf.mxu0
    %145 = vmatprep.mubr.f32.mxu0 0.0
    %146 = vmatmul.mubr.f32.gmra.mxu0 %v62
    %v147 = vpop.f32.mrf.mxu0
    %v148 = vadd.f32 %v45, %v147
    %v149 = vpop.f32.mrf.mxu0
    %150 = vmatprep.mubr.f32.mxu0 0.0
    %151 = vmatmul.mubr.f32.gmra.mxu0 %v65
    %v152 = vpop.f32.mrf.mxu0
    %v153 = vadd.f32 %v50, %v152
    %v154 = vpop.f32.mrf.mxu0
    %155 = vmatprep.mubr.f32.mxu0 0.0
    %156 = vmatmul.mubr.f32.gmra.mxu0 %v68
    %v157 = vpop.f32.mrf.mxu0
    %v158 = vadd.f32 %v55, %v157
    %v159 = vpop.f32.mrf.mxu0
    %160 = vdwg.mxu0
    %v161 = vmax.f32 %v143, 0.0
    %v162 = vmax.f32 %v148, 0.0
    %v163 = vmax.f32 %v153, 0.0
    %v164 = vmax.f32 %v158, 0.0
    %v165 = vld [vmem:[%s3] sm:$0xff]
    %v166 = vld [vmem:[%s3 + $0x8] sm:$0xff]
    %v167 = vld [vmem:[%s3 + $0x10] sm:$0xff]
    %v168 = vld [vmem:[%s3 + $0x18] sm:$0xff]
    %v169 = vld [vmem:[%s4] sm:$0xff]
    %v170 = vld [vmem:[%s4 + $0x8] sm:$0xff]
    %v171 = vld [vmem:[%s4 + $0x10] sm:$0xff]
    %v172 = vld [vmem:[%s4 + $0x18] sm:$0xff]
    %174 = vset.pattern.permute.xlu0 0
    %175 = vperm.xlu0 %174, %v169
    %v176 = vpop.permute.xlu0 %175
    %179 = vset.pattern.permute.xlu0 0
    %180 = vperm.xlu0 %179, %v170
    %v181 = vpop.permute.xlu0 %180
    %184 = vset.pattern.permute.xlu0 0
    %185 = vperm.xlu0 %184, %v171
    %v186 = vpop.permute.xlu0 %185
    %189 = vset.pattern.permute.xlu0 0
    %190 = vperm.xlu0 %189, %v172
    %v191 = vpop.permute.xlu0 %190
    %vm193 = vcmask 261120
    %v195 = vsel %vm193, %v165, 0
    %v198 = vsel %vm193, %v166, 0
    %v201 = vsel %vm193, %v167, 0
    %v204 = vsel %vm193, %v168, 0
    %206 = vmatprep.subr.mxu0 0.0
    %207 = vmatpush1.msra.mxu0 0.0
    %208 = vmatprep.subr.mxu0 0.0
    %209 = vmatpush1.msra.mxu0 0.0
    %210 = vmatprep.subr.mxu0 0.0
    %211 = vmatpush1.msra.mxu0 0.0
    %212 = vmatprep.subr.mxu0 0.0
    %213 = vmatpush1.msra.mxu0 0.0
    %214 = vmatprep.subr.mxu0 0.0
    %215 = vmatpush1.msra.mxu0 0.0
    %216 = vmatprep.subr.mxu0 0.0
    %217 = vmatpush1.msra.mxu0 0.0
    %218 = vmatprep.subr.mxu0 0.0
    %219 = vmatpush1.msra.mxu0 0.0
    %220 = vmatprep.subr.mxu0 0.0
    %221 = vmatpush1.msra.mxu0 0.0
    %222 = vmatprep.subr.mxu0 0.0
    %223 = vmatpush1.msra.mxu0 0.0
    %224 = vmatprep.subr.mxu0 0.0
    %225 = vmatpush1.msra.mxu0 0.0
    %226 = vmatprep.subr.mxu0 0.0
    %227 = vmatpush1.msra.mxu0 0.0
    %228 = vmatprep.subr.mxu0 0.0
    %229 = vmatpush1.msra.mxu0 0.0
    %230 = vmatprep.subr.mxu0 0.0
    %231 = vmatpush1.msra.mxu0 %v164
    %232 = vmatprep.subr.mxu0 0.0
    %233 = vmatpush1.msra.mxu0 %v163
    %234 = vmatprep.subr.mxu0 0.0
    %235 = vmatpush1.msra.mxu0 %v162
    %236 = vmatprep.subr.mxu0 0.0
    %237 = vmatpush1.msra.mxu0 %v161
    %238 = vmatprep.subr.mxu0 0.0
    %239 = vmatpush2.msra.mxu0 0.0
    %240 = vmatprep.subr.mxu0 0.0
    %241 = vmatpush2.msra.mxu0 0.0
    %242 = vmatprep.subr.mxu0 0.0
    %243 = vmatpush2.msra.mxu0 0.0
    %244 = vmatprep.subr.mxu0 0.0
    %245 = vmatpush2.msra.mxu0 0.0
    %246 = vmatprep.subr.mxu0 0.0
    %247 = vmatpush2.msra.mxu0 0.0
    %248 = vmatprep.subr.mxu0 0.0
    %249 = vmatpush2.msra.mxu0 0.0
    %250 = vmatprep.subr.mxu0 0.0
    %251 = vmatpush2.msra.mxu0 0.0
    %252 = vmatprep.subr.mxu0 0.0
    %253 = vmatpush2.msra.mxu0 0.0
    %254 = vmatprep.subr.mxu0 0.0
    %255 = vmatpush2.msra.mxu0 0.0
    %256 = vmatprep.subr.mxu0 0.0
    %257 = vmatpush2.msra.mxu0 0.0
    %258 = vmatprep.subr.mxu0 0.0
    %259 = vmatpush2.msra.mxu0 0.0
    %260 = vmatprep.subr.mxu0 0.0
    %261 = vmatpush2.msra.mxu0 0.0
    %262 = vmatprep.subr.mxu0 0.0
    %263 = vmatpush2.msra.mxu0 0.0
    %264 = vmatprep.subr.mxu0 0.0
    %265 = vmatpush2.msra.mxu0 0.0
    %266 = vmatprep.subr.mxu0 0.0
    %267 = vmatpush2.msra.mxu0 0.0
    %268 = vmatprep.subr.mxu0 0.0
    %269 = vmatpush2.msra.mxu0 0.0
    %270 = vmatprep.mubr.f32.mxu0 0.0
    %271 = vmatmul.mubr.f32.gmra.mxu0 %v195
    %v272 = vpop.f32.mrf.mxu0
    %v273 = vadd.f32 %v176, %v272
    %v274 = vpop.f32.mrf.mxu0
    %275 = vmatprep.mubr.f32.mxu0 0.0
    %276 = vmatmul.mubr.f32.gmra.mxu0 %v198
    %v277 = vpop.f32.mrf.mxu0
    %v278 = vadd.f32 %v181, %v277
    %v279 = vpop.f32.mrf.mxu0
    %280 = vmatprep.mubr.f32.mxu0 0.0
    %281 = vmatmul.mubr.f32.gmra.mxu0 %v201
    %v282 = vpop.f32.mrf.mxu0
    %v283 = vadd.f32 %v186, %v282
    %v284 = vpop.f32.mrf.mxu0
    %285 = vmatprep.mubr.f32.mxu0 0.0
    %286 = vmatmul.mubr.f32.gmra.mxu0 %v204
    %v287 = vpop.f32.mrf.mxu0
    %v288 = vadd.f32 %v191, %v287
    %v289 = vpop.f32.mrf.mxu0
    %290 = vdwg.mxu0
    %v291 = vand.u32 2147483647, %v273
    %vm292 = vcmp.le.f32.partialorder %v291, 0.7853982
    %vm293 = vcmp.lt.s32.totalorder %v273, 0
    %v294 = vand.u32 %v273, 2139095040
    %v295 = vshrl.u32 %v294, 23
    %v296 = vsub.s32 %v295, 127
    %v297 = vand.u32 2147483647, %v273
    %v298 = vand.u32 %v297, 8388607
    %v299 = vor.u32 %v298, 8388608
    %v300 = vsub.s32 0, %v299
    %v301 = vadd.s32 %v296, 1
    %vm302 = vcmp.gt.s32.totalorder %v301, 0
    %v303 = vsel %vm302, %v301, 0
    %v304 = vshrl.u32 %v303, 5
    %v305 = vand.u32 %v303, 31
    %v306 = vsub.s32 32, %v305
    %v307 = vshrl.u32 683565275, %v306
    %v308 = vshll.u32 683565275, %v305
    %v309 = vshrl.u32 2475754826, %v306
    %v310 = vor.u32 %v308, %v309
    %v311 = vshll.u32 2475754826, %v305
    %v312 = vshrl.u32 2131351028, %v306
    %v313 = vor.u32 %v311, %v312
    %v314 = vshll.u32 2131351028, %v305
    %v315 = vshrl.u32 2102212464, %v306
    %v316 = vor.u32 %v314, %v315
    %v317 = vshll.u32 2102212464, %v305
    %v318 = vshrl.u32 920167782, %v306
    %v319 = vor.u32 %v317, %v318
    %v320 = vshll.u32 920167782, %v305
    %v321 = vshrl.u32 1326507024, %v306
    %v322 = vor.u32 %v320, %v321
    %vm323 = vcmp.lt.s32.totalorder %v304, 1
    %vm324 = vcmp.lt.s32.totalorder %v304, 2
    %vm325 = vcmp.lt.s32.totalorder %v304, 3
    %vm326 = vcmp.lt.s32.totalorder %v304, 4
    %v327 = vsel %vm323, %v307, %v310
    %v328 = vsel %vm326, %v316, 2102212464
    %v329 = vsel %vm325, %v313, %v328
    %v330 = vsel %vm324, %v327, %v329
    %v331 = vsel %vm323, %v310, %v313
    %v332 = vsel %vm326, %v319, 920167782
    %v333 = vsel %vm325, %v316, %v332
    %v334 = vsel %vm324, %v331, %v333
    %v335 = vsel %vm323, %v313, %v316
    %v336 = vsel %vm326, %v322, 1326507024
    %v337 = vsel %vm325, %v319, %v336
    %v338 = vsel %vm324, %v335, %v337
    %v339 = vshll.u32 %v299, 8
    %v340 = vmul.u32.u64.compose %v339, %v338
    %v341 = vextract.low.u32 %v340
    %v342 = vextract.high.u32 %v340
    %v343 = vmul.u32.u64.compose %v339, %v334
    %v344 = vextract.low.u32 %v343
    %v345 = vextract.high.u32 %v343
    %v346 = vmul.u32 %v339, %v330
    %v347 = vadd.s32 %v342, %v344
    %vm348 = vc.u32 %v342, %v344
    %v349 = vadd.s32 %v345, 1
    %v350 = vsel %vm348, %v349, %v345
    %v351 = vadd.s32 %v346, %v350
    %v352 = vadd.s32 %v351, 536870912
    %v353 = vshrl.u32 %v352, 30
    %v354 = vshll.u32 %v353, 30
    %v355 = vsub.s32 %v351, %v354
    %vm356 = vcmp.lt.s32.totalorder %v355, 0
    %v357 = vsub.s32 0, %v355
    %v358 = vsel %vm356, %v357, %v355
    %v359 = vclz %v358
    %v360 = vsub.s32 %v359, 2
    %vm361 = vcmp.gt.s32.totalorder 0, %v360
    %v362 = vsel %vm361, 0, %v360
    %v363 = vsub.s32 32, %v362
    %v364 = vshll.u32 %v355, %v362
    %v365 = vshrl.u32 %v347, %v363
    %v366 = vor.u32 %v364, %v365
    %v367 = vsub.s32 4294967266, %v362
    %v368 = vadd.s32 %v367, 127
    %v369 = vshll.u32 %v368, 23
    %v370 = vor.u32 4788187, %v369
    %v371 = vand.u32 2147483647, %v370
    %v373 = vcvt.s32.f32 %v366
    %v374 = vmul.f32 %v373, %v371
    %v375 = vxor.u32 %v374, 2147483648
    %v376 = vsel %vm293, %v375, %v374
    %v377 = vsub.s32 4, %v353
    %v378 = vsel %vm293, %v377, %v353
    %v379 = vsel %vm292, %v273, %v376
    %v380 = vsel %vm292, 0, %v378
    %v381 = vcosq.f32.pop %v379
    %v382 = vsinq.f32.pop %v379
    %vm383 = vweird.f32 %v273
    %v384 = vadd.s32 %v380, 3
    %v385 = vand.u32 %v384, 3
    %vm386 = vcmp.lt.s32.totalorder %v385, 2
    %vm387 = vcmp.eq.s32.totalorder %v385, 0
    %v388 = vxor.u32 %v382, 2147483648
    %v389 = vsel %vm387, %v381, %v388
    %vm390 = vcmp.eq.s32.totalorder %v385, 2
    %v391 = vxor.u32 %v381, 2147483648
    %v392 = vsel %vm390, %v391, %v382
    %v393 = vsel %vm386, %v389, %v392
    %v394 = vsel %vm383, nan, %v393
    %v395 = vand.u32 2147483647, %v278
    %vm396 = vcmp.le.f32.partialorder %v395, 0.7853982
    %vm397 = vcmp.lt.s32.totalorder %v278, 0
    %v398 = vand.u32 %v278, 2139095040
    %v399 = vshrl.u32 %v398, 23
    %v400 = vsub.s32 %v399, 127
    %v401 = vand.u32 2147483647, %v278
    %v402 = vand.u32 %v401, 8388607
    %v403 = vor.u32 %v402, 8388608
    %v404 = vsub.s32 0, %v403
    %v405 = vadd.s32 %v400, 1
    %vm406 = vcmp.gt.s32.totalorder %v405, 0
    %v407 = vsel %vm406, %v405, 0
    %v408 = vshrl.u32 %v407, 5
    %v409 = vand.u32 %v407, 31
    %v410 = vsub.s32 32, %v409
    %v411 = vshrl.u32 683565275, %v410
    %v412 = vshll.u32 683565275, %v409
    %v413 = vshrl.u32 2475754826, %v410
    %v414 = vor.u32 %v412, %v413
    %v415 = vshll.u32 2475754826, %v409
    %v416 = vshrl.u32 2131351028, %v410
    %v417 = vor.u32 %v415, %v416
    %v418 = vshll.u32 2131351028, %v409
    %v419 = vshrl.u32 2102212464, %v410
    %v420 = vor.u32 %v418, %v419
    %v421 = vshll.u32 2102212464, %v409
    %v422 = vshrl.u32 920167782, %v410
    %v423 = vor.u32 %v421, %v422
    %v424 = vshll.u32 920167782, %v409
    %v425 = vshrl.u32 1326507024, %v410
    %v426 = vor.u32 %v424, %v425
    %vm427 = vcmp.lt.s32.totalorder %v408, 1
    %vm428 = vcmp.lt.s32.totalorder %v408, 2
    %vm429 = vcmp.lt.s32.totalorder %v408, 3
    %vm430 = vcmp.lt.s32.totalorder %v408, 4
    %v431 = vsel %vm427, %v411, %v414
    %v432 = vsel %vm430, %v420, 2102212464
    %v433 = vsel %vm429, %v417, %v432
    %v434 = vsel %vm428, %v431, %v433
    %v435 = vsel %vm427, %v414, %v417
    %v436 = vsel %vm430, %v423, 920167782
    %v437 = vsel %vm429, %v420, %v436
    %v438 = vsel %vm428, %v435, %v437
    %v439 = vsel %vm427, %v417, %v420
    %v440 = vsel %vm430, %v426, 1326507024
    %v441 = vsel %vm429, %v423, %v440
    %v442 = vsel %vm428, %v439, %v441
    %v443 = vshll.u32 %v403, 8
    %v444 = vmul.u32.u64.compose %v443, %v442
    %v445 = vextract.low.u32 %v444
    %v446 = vextract.high.u32 %v444
    %v447 = vmul.u32.u64.compose %v443, %v438
    %v448 = vextract.low.u32 %v447
    %v449 = vextract.high.u32 %v447
    %v450 = vmul.u32 %v443, %v434
    %v451 = vadd.s32 %v446, %v448
    %vm452 = vc.u32 %v446, %v448
    %v453 = vadd.s32 %v449, 1
    %v454 = vsel %vm452, %v453, %v449
    %v455 = vadd.s32 %v450, %v454
    %v456 = vadd.s32 %v455, 536870912
    %v457 = vshrl.u32 %v456, 30
    %v458 = vshll.u32 %v457, 30
    %v459 = vsub.s32 %v455, %v458
    %vm460 = vcmp.lt.s32.totalorder %v459, 0
    %v461 = vsub.s32 0, %v459
    %v462 = vsel %vm460, %v461, %v459
    %v463 = vclz %v462
    %v464 = vsub.s32 %v463, 2
    %vm465 = vcmp.gt.s32.totalorder 0, %v464
    %v466 = vsel %vm465, 0, %v464
    %v467 = vsub.s32 32, %v466
    %v468 = vshll.u32 %v459, %v466
    %v469 = vshrl.u32 %v451, %v467
    %v470 = vor.u32 %v468, %v469
    %v471 = vsub.s32 4294967266, %v466
    %v472 = vadd.s32 %v471, 127
    %v473 = vshll.u32 %v472, 23
    %v474 = vor.u32 4788187, %v473
    %v475 = vand.u32 2147483647, %v474
    %v477 = vcvt.s32.f32 %v470
    %v478 = vmul.f32 %v477, %v475
    %v479 = vxor.u32 %v478, 2147483648
    %v480 = vsel %vm397, %v479, %v478
    %v481 = vsub.s32 4, %v457
    %v482 = vsel %vm397, %v481, %v457
    %v483 = vsel %vm396, %v278, %v480
    %v484 = vsel %vm396, 0, %v482
    %v485 = vcosq.f32.pop %v483
    %v486 = vsinq.f32.pop %v483
    %vm487 = vweird.f32 %v278
    %v488 = vadd.s32 %v484, 3
    %v489 = vand.u32 %v488, 3
    %vm490 = vcmp.lt.s32.totalorder %v489, 2
    %vm491 = vcmp.eq.s32.totalorder %v489, 0
    %v492 = vxor.u32 %v486, 2147483648
    %v493 = vsel %vm491, %v485, %v492
    %vm494 = vcmp.eq.s32.totalorder %v489, 2
    %v495 = vxor.u32 %v485, 2147483648
    %v496 = vsel %vm494, %v495, %v486
    %v497 = vsel %vm490, %v493, %v496
    %v498 = vsel %vm487, nan, %v497
    %v499 = vand.u32 2147483647, %v283
    %vm500 = vcmp.le.f32.partialorder %v499, 0.7853982
    %vm501 = vcmp.lt.s32.totalorder %v283, 0
    %v502 = vand.u32 %v283, 2139095040
    %v503 = vshrl.u32 %v502, 23
    %v504 = vsub.s32 %v503, 127
    %v505 = vand.u32 2147483647, %v283
    %v506 = vand.u32 %v505, 8388607
    %v507 = vor.u32 %v506, 8388608
    %v508 = vsub.s32 0, %v507
    %v509 = vadd.s32 %v504, 1
    %vm510 = vcmp.gt.s32.totalorder %v509, 0
    %v511 = vsel %vm510, %v509, 0
    %v512 = vshrl.u32 %v511, 5
    %v513 = vand.u32 %v511, 31
    %v514 = vsub.s32 32, %v513
    %v515 = vshrl.u32 683565275, %v514
    %v516 = vshll.u32 683565275, %v513
    %v517 = vshrl.u32 2475754826, %v514
    %v518 = vor.u32 %v516, %v517
    %v519 = vshll.u32 2475754826, %v513
    %v520 = vshrl.u32 2131351028, %v514
    %v521 = vor.u32 %v519, %v520
    %v522 = vshll.u32 2131351028, %v513
    %v523 = vshrl.u32 2102212464, %v514
    %v524 = vor.u32 %v522, %v523
    %v525 = vshll.u32 2102212464, %v513
    %v526 = vshrl.u32 920167782, %v514
    %v527 = vor.u32 %v525, %v526
    %v528 = vshll.u32 920167782, %v513
    %v529 = vshrl.u32 1326507024, %v514
    %v530 = vor.u32 %v528, %v529
    %vm531 = vcmp.lt.s32.totalorder %v512, 1
    %vm532 = vcmp.lt.s32.totalorder %v512, 2
    %vm533 = vcmp.lt.s32.totalorder %v512, 3
    %vm534 = vcmp.lt.s32.totalorder %v512, 4
    %v535 = vsel %vm531, %v515, %v518
    %v536 = vsel %vm534, %v524, 2102212464
    %v537 = vsel %vm533, %v521, %v536
    %v538 = vsel %vm532, %v535, %v537
    %v539 = vsel %vm531, %v518, %v521
    %v540 = vsel %vm534, %v527, 920167782
    %v541 = vsel %vm533, %v524, %v540
    %v542 = vsel %vm532, %v539, %v541
    %v543 = vsel %vm531, %v521, %v524
    %v544 = vsel %vm534, %v530, 1326507024
    %v545 = vsel %vm533, %v527, %v544
    %v546 = vsel %vm532, %v543, %v545
    %v547 = vshll.u32 %v507, 8
    %v548 = vmul.u32.u64.compose %v547, %v546
    %v549 = vextract.low.u32 %v548
    %v550 = vextract.high.u32 %v548
    %v551 = vmul.u32.u64.compose %v547, %v542
    %v552 = vextract.low.u32 %v551
    %v553 = vextract.high.u32 %v551
    %v554 = vmul.u32 %v547, %v538
    %v555 = vadd.s32 %v550, %v552
    %vm556 = vc.u32 %v550, %v552
    %v557 = vadd.s32 %v553, 1
    %v558 = vsel %vm556, %v557, %v553
    %v559 = vadd.s32 %v554, %v558
    %v560 = vadd.s32 %v559, 536870912
    %v561 = vshrl.u32 %v560, 30
    %v562 = vshll.u32 %v561, 30
    %v563 = vsub.s32 %v559, %v562
    %vm564 = vcmp.lt.s32.totalorder %v563, 0
    %v565 = vsub.s32 0, %v563
    %v566 = vsel %vm564, %v565, %v563
    %v567 = vclz %v566
    %v568 = vsub.s32 %v567, 2
    %vm569 = vcmp.gt.s32.totalorder 0, %v568
    %v570 = vsel %vm569, 0, %v568
    %v571 = vsub.s32 32, %v570
    %v572 = vshll.u32 %v563, %v570
    %v573 = vshrl.u32 %v555, %v571
    %v574 = vor.u32 %v572, %v573
    %v575 = vsub.s32 4294967266, %v570
    %v576 = vadd.s32 %v575, 127
    %v577 = vshll.u32 %v576, 23
    %v578 = vor.u32 4788187, %v577
    %v579 = vand.u32 2147483647, %v578
    %v581 = vcvt.s32.f32 %v574
    %v582 = vmul.f32 %v581, %v579
    %v583 = vxor.u32 %v582, 2147483648
    %v584 = vsel %vm501, %v583, %v582
    %v585 = vsub.s32 4, %v561
    %v586 = vsel %vm501, %v585, %v561
    %v587 = vsel %vm500, %v283, %v584
    %v588 = vsel %vm500, 0, %v586
    %v589 = vcosq.f32.pop %v587
    %v590 = vsinq.f32.pop %v587
    %vm591 = vweird.f32 %v283
    %v592 = vadd.s32 %v588, 3
    %v593 = vand.u32 %v592, 3
    %vm594 = vcmp.lt.s32.totalorder %v593, 2
    %vm595 = vcmp.eq.s32.totalorder %v593, 0
    %v596 = vxor.u32 %v590, 2147483648
    %v597 = vsel %vm595, %v589, %v596
    %vm598 = vcmp.eq.s32.totalorder %v593, 2
    %v599 = vxor.u32 %v589, 2147483648
    %v600 = vsel %vm598, %v599, %v590
    %v601 = vsel %vm594, %v597, %v600
    %v602 = vsel %vm591, nan, %v601
    %v603 = vand.u32 2147483647, %v288
    %vm604 = vcmp.le.f32.partialorder %v603, 0.7853982
    %vm605 = vcmp.lt.s32.totalorder %v288, 0
    %v606 = vand.u32 %v288, 2139095040
    %v607 = vshrl.u32 %v606, 23
    %v608 = vsub.s32 %v607, 127
    %v609 = vand.u32 2147483647, %v288
    %v610 = vand.u32 %v609, 8388607
    %v611 = vor.u32 %v610, 8388608
    %v612 = vsub.s32 0, %v611
    %v613 = vadd.s32 %v608, 1
    %vm614 = vcmp.gt.s32.totalorder %v613, 0
    %v615 = vsel %vm614, %v613, 0
    %v616 = vshrl.u32 %v615, 5
    %v617 = vand.u32 %v615, 31
    %v618 = vsub.s32 32, %v617
    %v619 = vshrl.u32 683565275, %v618
    %v620 = vshll.u32 683565275, %v617
    %v621 = vshrl.u32 2475754826, %v618
    %v622 = vor.u32 %v620, %v621
    %v623 = vshll.u32 2475754826, %v617
    %v624 = vshrl.u32 2131351028, %v618
    %v625 = vor.u32 %v623, %v624
    %v626 = vshll.u32 2131351028, %v617
    %v627 = vshrl.u32 2102212464, %v618
    %v628 = vor.u32 %v626, %v627
    %v629 = vshll.u32 2102212464, %v617
    %v630 = vshrl.u32 920167782, %v618
    %v631 = vor.u32 %v629, %v630
    %v632 = vshll.u32 920167782, %v617
    %v633 = vshrl.u32 1326507024, %v618
    %v634 = vor.u32 %v632, %v633
    %vm635 = vcmp.lt.s32.totalorder %v616, 1
    %vm636 = vcmp.lt.s32.totalorder %v616, 2
    %vm637 = vcmp.lt.s32.totalorder %v616, 3
    %vm638 = vcmp.lt.s32.totalorder %v616, 4
    %v639 = vsel %vm635, %v619, %v622
    %v640 = vsel %vm638, %v628, 2102212464
    %v641 = vsel %vm637, %v625, %v640
    %v642 = vsel %vm636, %v639, %v641
    %v643 = vsel %vm635, %v622, %v625
    %v644 = vsel %vm638, %v631, 920167782
    %v645 = vsel %vm637, %v628, %v644
    %v646 = vsel %vm636, %v643, %v645
    %v647 = vsel %vm635, %v625, %v628
    %v648 = vsel %vm638, %v634, 1326507024
    %v649 = vsel %vm637, %v631, %v648
    %v650 = vsel %vm636, %v647, %v649
    %v651 = vshll.u32 %v611, 8
    %v652 = vmul.u32.u64.compose %v651, %v650
    %v653 = vextract.low.u32 %v652
    %v654 = vextract.high.u32 %v652
    %v655 = vmul.u32.u64.compose %v651, %v646
    %v656 = vextract.low.u32 %v655
    %v657 = vextract.high.u32 %v655
    %v658 = vmul.u32 %v651, %v642
    %v659 = vadd.s32 %v654, %v656
    %vm660 = vc.u32 %v654, %v656
    %v661 = vadd.s32 %v657, 1
    %v662 = vsel %vm660, %v661, %v657
    %v663 = vadd.s32 %v658, %v662
    %v664 = vadd.s32 %v663, 536870912
    %v665 = vshrl.u32 %v664, 30
    %v666 = vshll.u32 %v665, 30
    %v667 = vsub.s32 %v663, %v666
    %vm668 = vcmp.lt.s32.totalorder %v667, 0
    %v669 = vsub.s32 0, %v667
    %v670 = vsel %vm668, %v669, %v667
    %v671 = vclz %v670
    %v672 = vsub.s32 %v671, 2
    %vm673 = vcmp.gt.s32.totalorder 0, %v672
    %v674 = vsel %vm673, 0, %v672
    %v675 = vsub.s32 32, %v674
    %v676 = vshll.u32 %v667, %v674
    %v677 = vshrl.u32 %v659, %v675
    %v678 = vor.u32 %v676, %v677
    %v679 = vsub.s32 4294967266, %v674
    %v680 = vadd.s32 %v679, 127
    %v681 = vshll.u32 %v680, 23
    %v682 = vor.u32 4788187, %v681
    %v683 = vand.u32 2147483647, %v682
    %v685 = vcvt.s32.f32 %v678
    %v686 = vmul.f32 %v685, %v683
    %v687 = vxor.u32 %v686, 2147483648
    %v688 = vsel %vm605, %v687, %v686
    %v689 = vsub.s32 4, %v665
    %v690 = vsel %vm605, %v689, %v665
    %v691 = vsel %vm604, %v288, %v688
    %v692 = vsel %vm604, 0, %v690
    %v693 = vcosq.f32.pop %v691
    %v694 = vsinq.f32.pop %v691
    %vm695 = vweird.f32 %v288
    %v696 = vadd.s32 %v692, 3
    %v697 = vand.u32 %v696, 3
    %vm698 = vcmp.lt.s32.totalorder %v697, 2
    %vm699 = vcmp.eq.s32.totalorder %v697, 0
    %v700 = vxor.u32 %v694, 2147483648
    %v701 = vsel %vm699, %v693, %v700
    %vm702 = vcmp.eq.s32.totalorder %v697, 2
    %v703 = vxor.u32 %v693, 2147483648
    %v704 = vsel %vm702, %v703, %v694
    %v705 = vsel %vm698, %v701, %v704
    %v706 = vsel %vm695, nan, %v705
    %v707 = vld [vmem:[%s5] sm:$0x3]
    %v708 = vld [vmem:[%s6] sm:$0x3]
    %710 = vset.pattern.permute.xlu0 0
    %711 = vperm.xlu0 %710, %v708
    %v712 = vpop.permute.xlu0 %711
    %v715 = vsel %vm193, %v707, 0
    %717 = vmatprep.subr.mxu0 0.0
    %718 = vmatpush1.msra.mxu0 0.0
    %719 = vmatprep.subr.mxu0 0.0
    %720 = vmatpush1.msra.mxu0 0.0
    %721 = vmatprep.subr.mxu0 0.0
    %722 = vmatpush1.msra.mxu0 0.0
    %723 = vmatprep.subr.mxu0 0.0
    %724 = vmatpush1.msra.mxu0 0.0
    %725 = vmatprep.subr.mxu0 0.0
    %726 = vmatpush1.msra.mxu0 0.0
    %727 = vmatprep.subr.mxu0 0.0
    %728 = vmatpush1.msra.mxu0 0.0
    %729 = vmatprep.subr.mxu0 0.0
    %730 = vmatpush1.msra.mxu0 0.0
    %731 = vmatprep.subr.mxu0 0.0
    %732 = vmatpush1.msra.mxu0 0.0
    %733 = vmatprep.subr.mxu0 0.0
    %734 = vmatpush1.msra.mxu0 0.0
    %735 = vmatprep.subr.mxu0 0.0
    %736 = vmatpush1.msra.mxu0 0.0
    %737 = vmatprep.subr.mxu0 0.0
    %738 = vmatpush1.msra.mxu0 0.0
    %739 = vmatprep.subr.mxu0 0.0
    %740 = vmatpush1.msra.mxu0 0.0
    %741 = vmatprep.subr.mxu0 0.0
    %742 = vmatpush1.msra.mxu0 %v706
    %743 = vmatprep.subr.mxu0 0.0
    %744 = vmatpush1.msra.mxu0 %v602
    %745 = vmatprep.subr.mxu0 0.0
    %746 = vmatpush1.msra.mxu0 %v498
    %747 = vmatprep.subr.mxu0 0.0
    %748 = vmatpush1.msra.mxu0 %v394
    %749 = vmatprep.subr.mxu0 0.0
    %750 = vmatpush2.msra.mxu0 0.0
    %751 = vmatprep.subr.mxu0 0.0
    %752 = vmatpush2.msra.mxu0 0.0
    %753 = vmatprep.subr.mxu0 0.0
    %754 = vmatpush2.msra.mxu0 0.0
    %755 = vmatprep.subr.mxu0 0.0
    %756 = vmatpush2.msra.mxu0 0.0
    %757 = vmatprep.subr.mxu0 0.0
    %758 = vmatpush2.msra.mxu0 0.0
    %759 = vmatprep.subr.mxu0 0.0
    %760 = vmatpush2.msra.mxu0 0.0
    %761 = vmatprep.subr.mxu0 0.0
    %762 = vmatpush2.msra.mxu0 0.0
    %763 = vmatprep.subr.mxu0 0.0
    %764 = vmatpush2.msra.mxu0 0.0
    %765 = vmatprep.subr.mxu0 0.0
    %766 = vmatpush2.msra.mxu0 0.0
    %767 = vmatprep.subr.mxu0 0.0
    %768 = vmatpush2.msra.mxu0 0.0
    %769 = vmatprep.subr.mxu0 0.0
    %770 = vmatpush2.msra.mxu0 0.0
    %771 = vmatprep.subr.mxu0 0.0
    %772 = vmatpush2.msra.mxu0 0.0
    %773 = vmatprep.subr.mxu0 0.0
    %774 = vmatpush2.msra.mxu0 0.0
    %775 = vmatprep.subr.mxu0 0.0
    %776 = vmatpush2.msra.mxu0 0.0
    %777 = vmatprep.subr.mxu0 0.0
    %778 = vmatpush2.msra.mxu0 0.0
    %779 = vmatprep.subr.mxu0 0.0
    %780 = vmatpush2.msra.mxu0 0.0
    %781 = vmatprep.mubr.f32.mxu0 0.0
    %782 = vmatmul.mubr.f32.gmra.mxu0 %v715
    %v783 = vpop.f32.mrf.mxu0
    %v784 = vadd.f32 %v712, %v783
    %v785 = vpop.f32.mrf.mxu0
    %786 = vdwg.mxu0
    %vm787 = vcmask 123904
    %788 = vst.msk [vmem:[#allocation2] sm:$0x3] %vm787, %v784
    // Predicated region
    $region30: #{tpu_custom_call.1} parent=1 // pred_check
      _
    $region31: #{tpu_custom_call.1} parent=1 // pred_check_branch
      %790 = sbr.rel (0) target = $region33
    $region32: #{tpu_custom_call.1} parent=1 // pred_region
      %s792 = ssub.s32 32, 32
      %793 = vsyncadd [#allocation3], %s792
      %s795 = sshll.u32 [#allocation2], 4
      %s796 = int_to_ptr.vmem [resolvable:$true] %s795
      %798 = dma.vmem_to_hbm [thread:$0]  %s796, 32, %s7, [#allocation3]
    $region33: #{tpu_custom_call.1} parent=1 // pred_fallthru
      _
    // Predicated region
    $region34: #{tpu_custom_call.1} parent=1 // pred_check
      _
    $region35: #{tpu_custom_call.1} parent=1 // pred_check_branch
      %800 = sbr.rel (0) target = $region37
    $region36: #{tpu_custom_call.1} parent=1 // pred_region
      %801 = dma.done [#allocation3], 32
    $region37: #{tpu_custom_call.1} parent=1 // pred_fallthru
      _
    %802 = vsyncpa [#allocation3], 1

</llo_original>
